<compile_context>
chip_gen: v7x
topology: tpu7x:2x2x1
jax: 0.10.0
libtpu: 0.0.40
codegen_flags: <defaults>
</compile_context>

<pallas_src>
import functools

import jax
import jax.numpy as jnp
import numpy as np
from jax import lax
from jax.experimental import pallas as pl
from jax.experimental.pallas import tpu as pltpu


def _ceil_to(n, m):
    return ((n + m - 1) // m) * m


# --------------------------------------------------------------------------
# Fused kernel: spatial-sum accumulation + featurizer matmul + classifier
# matmul.  Grid = (batch_tiles, spatial_tiles); the spatial axis is a
# reduction axis (accumulator zeroed at s==0, matmuls at the last step).
# --------------------------------------------------------------------------
def _fused_forward_kernel(x_ref, wf_ref, bf_ref, wct_ref, bc_ref, out_ref,
                          acc_ref, *, S, TS, inv_s):
    s = pl.program_id(1)
    n_s = pl.num_programs(1)

    @pl.when(s == 0)
    def _init():
        acc_ref[...] = jnp.zeros_like(acc_ref)

    x = x_ref[...].astype(jnp.float32)                # (TB, Cin, TS)

    if S % TS != 0:
        # Ragged last spatial tile: mask the out-of-range lanes (garbage from
        # the partial boundary block) before summing.
        @pl.when(s == n_s - 1)
        def _masked_sum():
            lane = lax.broadcasted_iota(jnp.int32, x.shape, dimension=2)
            valid = lane < (S - s * TS)
            acc_ref[...] += jnp.sum(jnp.where(valid, x, 0.0), axis=-1)

        @pl.when(s < n_s - 1)
        def _full_sum():
            acc_ref[...] += jnp.sum(x, axis=-1)
    else:
        acc_ref[...] += jnp.sum(x, axis=-1)

    @pl.when(s == n_s - 1)
    def _epilogue():
        # mean = (f32 sum) * 1/(H*W), applied once here (no weight rescaling).
        pooled = (acc_ref[...] * inv_s).astype(jnp.bfloat16)      # (TB, Cin)
        z = jnp.dot(pooled, wf_ref[...],
                    preferred_element_type=jnp.float32) + bf_ref[...]
        logits = jnp.dot(z.astype(jnp.bfloat16), wct_ref[...],
                         preferred_element_type=jnp.float32) + bc_ref[...]
        out_ref[...] = logits


def _const_spec(shape, single_buffer):
    """BlockSpec for a constant (grid-invariant) operand; single-buffered when
    supported and requested, otherwise the plain (double-buffered) spec."""
    ndim = len(shape)
    index_map = lambda b, s: (0,) * ndim
    if single_buffer and hasattr(pl, "Buffered"):
        try:
            return pl.BlockSpec(shape, index_map, pipeline_mode=pl.Buffered(1))
        except TypeError:
            pass
    return pl.BlockSpec(shape, index_map)


def _fused_forward(x_flat, wf, bf, wct, bc, *, batch_tile, spatial_tile,
                   single_buffer_weights):
    Bp, Cin, S = x_flat.shape
    Dp = wf.shape[1]
    Cp = wct.shape[1]
    TB, TS = batch_tile, spatial_tile
    grid = (Bp // TB, pl.cdiv(S, TS))

    kernel = functools.partial(_fused_forward_kernel, S=S, TS=TS,
                               inv_s=1.0 / float(S))

    # VMEM accounting: double-buffered x blocks + resident weights (+biases) +
    # f32 accumulator + double-buffered output block.
    itemsize = x_flat.dtype.itemsize
    x_block_bytes = TB * Cin * TS * itemsize
    w_bytes = (wf.size * wf.dtype.itemsize + bf.size * bf.dtype.itemsize +
               wct.size * wct.dtype.itemsize + bc.size * bc.dtype.itemsize)
    w_factor = 1 if single_buffer_weights else 2
    acc_bytes = _ceil_to(TB, 8) * _ceil_to(Cin, 128) * 4
    out_block_bytes = TB * Cp * 4
    need = (2 * x_block_bytes + w_factor * w_bytes + acc_bytes
            + 2 * out_block_bytes)
    vmem_limit = int(min(max(int(need * 1.25) + (4 << 20), 32 << 20),
                         100 << 20))

    flops = Bp * Cin * S + 2 * Bp * Cin * Dp + 2 * Bp * Dp * Cp
    bytes_accessed = Bp * Cin * S * itemsize + w_bytes + Bp * Cp * 4
    cost = pl.CostEstimate(flops=int(flops), transcendentals=0,
                           bytes_accessed=int(bytes_accessed))

    return pl.pallas_call(
        kernel,
        out_shape=jax.ShapeDtypeStruct((Bp, Cp), jnp.float32),
        grid_spec=pltpu.PrefetchScalarGridSpec(
            num_scalar_prefetch=0,
            grid=grid,
            in_specs=[
                pl.BlockSpec((TB, Cin, TS), lambda b, s: (b, 0, s)),
                _const_spec((Cin, Dp), single_buffer_weights),
                _const_spec((1, Dp), single_buffer_weights),
                _const_spec((Dp, Cp), single_buffer_weights),
                _const_spec((1, Cp), single_buffer_weights),
            ],
            out_specs=pl.BlockSpec((TB, Cp), lambda b, s: (b, 0)),
            scratch_shapes=[pltpu.VMEM((TB, Cin), jnp.float32)],
        ),
        compiler_params=pltpu.CompilerParams(
            dimension_semantics=("parallel", "arbitrary"),
            vmem_limit_bytes=vmem_limit,
        ),
        cost_estimate=cost,
    )(x_flat, wf, bf, wct, bc)


@functools.partial(jax.jit,
                   static_argnames=("num_classes", "batch_tile",
                                    "spatial_tile", "single_buffer_weights"))
def _forward_jit(x, wf, bf, wct, bc, *, num_classes, batch_tile, spatial_tile,
                 single_buffer_weights):
    B, Cin, H, W = x.shape
    x_flat = x.reshape(B, Cin, H * W)   # contiguous merge: no data movement
    logits = _fused_forward(x_flat, wf, bf, wct, bc,
                            batch_tile=batch_tile, spatial_tile=spatial_tile,
                            single_buffer_weights=single_buffer_weights)
    return logits[:, :num_classes]


# --------------------------------------------------------------------------
# without_adapt_model: frozen forward, returns logits only.
# --------------------------------------------------------------------------
class WithoutAdaptModelJax:
    def __init__(self, featurizer_w, featurizer_b, classifier_w, classifier_b,
                 *, batch_tile=8, spatial_tile=None,
                 x_block_bytes=12 * 1024 * 1024):
        C_in, D = featurizer_w.shape
        C = classifier_w.shape[0]
        self.C_in, self.D, self.C = C_in, D, C
        self.batch_tile = int(batch_tile)
        self.spatial_tile = spatial_tile          # optional override (elems)
        self.x_block_bytes = int(x_block_bytes)   # per-x-buffer VMEM budget

        Dp = _ceil_to(D, 128)
        Cp = _ceil_to(C, 128)
        self.Dp, self.Cp = Dp, Cp

        # Lane-dense zero-padded parameters, prepared once.  Weights in bf16
        # (MXU-native, halves resident VMEM / HBM bytes), biases in f32 (added
        # after the f32-accumulated matmuls).  Zero-padded wf columns keep the
        # padded feature lanes exactly zero, so padded wct rows / bc columns
        # contribute nothing to the real logits.
        wf = jnp.zeros((C_in, Dp), jnp.float32).at[:, :D].set(
            jnp.asarray(featurizer_w, jnp.float32))
        self.wf_bf = wf.astype(jnp.bfloat16)
        self.bf2 = jnp.zeros((1, Dp), jnp.float32).at[0, :D].set(
            jnp.asarray(featurizer_b, jnp.float32))
        wct = jnp.zeros((Dp, Cp), jnp.float32).at[:D, :C].set(
            jnp.asarray(classifier_w, jnp.float32).T)
        self.wct_bf = wct.astype(jnp.bfloat16)
        self.bc2 = jnp.zeros((1, Cp), jnp.float32).at[0, :C].set(
            jnp.asarray(classifier_b, jnp.float32))

        w_total = (self.wf_bf.size * 2 + self.wct_bf.size * 2 +
                   self.bf2.size * 4 + self.bc2.size * 4)
        # Single-buffer the constant operands only when they are big enough
        # for the VMEM saving to matter (tiny shapes stay on the plain path).
        self._single_buffer_weights = bool(
            w_total >= (2 << 20)) and hasattr(pl, "Buffered")

    # Batch tile must be a multiple of 8 or the full batch (sublane rule on
    # the output block), must divide B exactly (no ragged leading x blocks),
    # and should give >=2 tiles for megacore when the batch allows it.
    def _choose_batch_tile(self, B):
        if B % 8 == 0 and B > 8:
            tb = max(8, (min(self.batch_tile, B) // 8) * 8)
            while B % tb:
                tb -= 8
            return tb
        if B <= max(self.batch_tile, 8):
            return B
        return 8            # large batch not a multiple of 8 -> tiny pad

    # Spatial tile: the whole extent in one block when it fits the VMEM
    # budget (no remainder, works for any S, e.g. 7x7=49), otherwise the
    # largest multiple of 128 that fits (remainder masked in-kernel).
    def _choose_spatial_tile(self, S, Cin, TB, itemsize):
        if self.spatial_tile is not None:
            ts = int(self.spatial_tile)
        else:
            ts = self.x_block_bytes // max(1, TB * Cin * itemsize)
        if ts >= S:
            return S
        return max(128, (ts // 128) * 128)

    def forward(self, x):
        x = jnp.asarray(x)
        if x.dtype not in (jnp.float32, jnp.bfloat16):
            x = x.astype(jnp.float32)
        B, C_in, H, W = x.shape
        assert C_in == self.C_in
        S = H * W

        TB = self._choose_batch_tile(B)
        pad_b = (-B) % TB
        if pad_b:   # rare: large batch that is not a multiple of 8
            x = jnp.pad(x, ((0, pad_b), (0, 0), (0, 0), (0, 0)))
        TS = self._choose_spatial_tile(S, C_in, TB, x.dtype.itemsize)

        logits = _forward_jit(
            x, self.wf_bf, self.bf2, self.wct_bf, self.bc2,
            num_classes=self.C, batch_tile=TB, spatial_tile=TS,
            single_buffer_weights=self._single_buffer_weights)
        if pad_b:
            logits = logits[:B]
        return logits

    __call__ = forward


# --------------------------------------------------------------------------
# Pure numpy reference mirroring the PyTorch module (f32 math).
# --------------------------------------------------------------------------
def reference_forward(x, wf, bf, wc, bc):
    B, C_in, H, W = x.shape
    pooled = x.reshape(B, C_in, -1).mean(-1)
    z = pooled @ wf + bf
    return z @ wc.T + bc


if __name__ == "__main__":
    key = jax.random.PRNGKey(0)
    B, C_IN, H, W = 2, 4, 16, 16
    D, NUM_CLASSES = 32, 8

    k1, k2, k3, k4, k5, k6, k7 = jax.random.split(key, 7)
    wf = jax.random.normal(k1, (C_IN, D), jnp.float32) / jnp.sqrt(C_IN)
    bf = jax.random.normal(k2, (D,), jnp.float32) * 0.1
    w_cls = jax.random.normal(k3, (NUM_CLASSES, D), jnp.float32) / jnp.sqrt(D)
    b_cls = jax.random.normal(k4, (NUM_CLASSES,), jnp.float32) * 0.1

    model = WithoutAdaptModelJax(wf, bf, w_cls, b_cls)

    def check(x_in, mdl, tag):
        out = jax.block_until_ready(mdl.forward(x_in))
        ref = reference_forward(np.asarray(x_in, np.float32), np.asarray(wf),
                                np.asarray(bf), np.asarray(w_cls),
                                np.asarray(b_cls))
        np.testing.assert_allclose(np.asarray(out), ref, rtol=5e-2, atol=1e-2,
                                   err_msg=tag)

    # 1) Full-spatial single-step block (S=256), small batch -> one full block.
    x1 = jax.random.normal(k5, (B, C_IN, H, W), jnp.float32)
    check(x1, model, "case1")

    # 2) Multi-step spatial reduction with a ragged, in-kernel-masked last
    #    tile (S=324 -> tiles of 128) and an odd batch (B=3, one full block).
    model_small_tile = WithoutAdaptModelJax(wf, bf, w_cls, b_cls,
                                            spatial_tile=128)
    x2 = jax.random.normal(k6, (3, C_IN, 18, 18), jnp.float32)
    check(x2, model_small_tile, "case2")

    # 3) Batch-tiled path (B=16 -> two parallel batch tiles of 8) with a small
    #    non-multiple-of-128 spatial extent taken as one full block (S=49).
    x3 = jax.random.normal(k7, (16, C_IN, 7, 7), jnp.float32)
    check(x3, model, "case3")

    # 4) bf16 activation streaming (reference uses the same rounded input).
    x4 = x1.astype(jnp.bfloat16)
    out4 = jax.block_until_ready(model.forward(x4))
    ref4 = reference_forward(np.asarray(x4.astype(jnp.float32)),
                             np.asarray(wf), np.asarray(bf),
                             np.asarray(w_cls), np.asarray(b_cls))
    np.testing.assert_allclose(np.asarray(out4), ref4, rtol=5e-2, atol=1e-2,
                               err_msg="case4")

    print("KERNEL_OK")
</pallas_src>

<mosaic_0001>
module attributes {stable_mosaic.version = 11 : i64} {
  func.func @_fused_forward_kernel(%arg0: i32, %arg1: i32, %arg2: memref<2x4x256xf32, #tpu.memory_space<vmem>>, %arg3: memref<4x128xbf16, #tpu.memory_space<vmem>>, %arg4: memref<1x128xf32, #tpu.memory_space<vmem>>, %arg5: memref<128x128xbf16, #tpu.memory_space<vmem>>, %arg6: memref<1x128xf32, #tpu.memory_space<vmem>>, %arg7: memref<2x128xf32, #tpu.memory_space<vmem>>, %arg8: memref<2x4xf32, #tpu.memory_space<vmem>>) attributes {dimension_semantics = [#tpu.dimension_semantics<parallel>, #tpu.dimension_semantics<arbitrary>], iteration_bounds = array<i64: 1, 1>, scalar_prefetch = 0 : i64, scratch_operands = 1 : i64, tpu.core_type = #tpu.core_type<tc>, window_params = [{transform_indices = @transform_0, window_bounds = array<i64: 2, 4, 256>}, {pipeline_mode = #tpu.pipeline_mode<synchronous>, transform_indices = @transform_1, window_bounds = array<i64: 4, 128>}, {pipeline_mode = #tpu.pipeline_mode<synchronous>, transform_indices = @transform_2, window_bounds = array<i64: 1, 128>}, {pipeline_mode = #tpu.pipeline_mode<synchronous>, transform_indices = @transform_3, window_bounds = array<i64: 128, 128>}, {pipeline_mode = #tpu.pipeline_mode<synchronous>, transform_indices = @transform_4, window_bounds = array<i64: 1, 128>}, {transform_indices = @transform_5, window_bounds = array<i64: 2, 128>}]} {
    %c0_i32 = arith.constant 0 : i32
    %0 = arith.cmpi eq, %arg1, %c0_i32 : i32
    %1 = arith.extui %0 : i1 to i32
    %c0_i32_0 = arith.constant 0 : i32
    %2 = arith.cmpi ne, %1, %c0_i32_0 : i32
    scf.if %2 {
      %cst_9 = arith.constant 0.000000e+00 : f32
      %11 = vector.broadcast %cst_9 : f32 to vector<2x4xf32>
      %c0_10 = arith.constant 0 : index
      %c0_11 = arith.constant 0 : index
      %12 = vector.load %arg8[%c0_10, %c0_11] : memref<2x4xf32, #tpu.memory_space<vmem>>, vector<2x4xf32>
      tpu.vector_store %arg8[%c0_10, %c0_11], %11 {strides = array<i32>} : memref<2x4xf32, #tpu.memory_space<vmem>>, vector<2x4xf32>,
    } else {
    }
    %c0 = arith.constant 0 : index
    %c0_1 = arith.constant 0 : index
    %c0_2 = arith.constant 0 : index
    %3 = vector.load %arg2[%c0, %c0_1, %c0_2] : memref<2x4x256xf32, #tpu.memory_space<vmem>>, vector<2x4x256xf32>
    %c0_3 = arith.constant 0 : index
    %c0_4 = arith.constant 0 : index
    %4 = vector.load %arg8[%c0_3, %c0_4] : memref<2x4xf32, #tpu.memory_space<vmem>>, vector<2x4xf32>
    %cst = arith.constant dense<0.000000e+00> : vector<2x4xf32>
    %5 = vector.multi_reduction <add>, %3, %cst [2] : vector<2x4x256xf32> to vector<2x4xf32>
    %6 = arith.addf %4, %5 : vector<2x4xf32>
    %c0_5 = arith.constant 0 : index
    %c0_6 = arith.constant 0 : index
    %7 = vector.load %arg8[%c0_5, %c0_6] : memref<2x4xf32, #tpu.memory_space<vmem>>, vector<2x4xf32>
    tpu.vector_store %arg8[%c0_5, %c0_6], %6 {strides = array<i32>} : memref<2x4xf32, #tpu.memory_space<vmem>>, vector<2x4xf32>,
    %c0_i32_7 = arith.constant 0 : i32
    %8 = arith.cmpi eq, %arg1, %c0_i32_7 : i32
    %9 = arith.extui %8 : i1 to i32
    %c0_i32_8 = arith.constant 0 : i32
    %10 = arith.cmpi ne, %9, %c0_i32_8 : i32
    scf.if %10 {
      %c0_9 = arith.constant 0 : index
      %c0_10 = arith.constant 0 : index
      %11 = vector.load %arg8[%c0_9, %c0_10] : memref<2x4xf32, #tpu.memory_space<vmem>>, vector<2x4xf32>
      %cst_11 = arith.constant 3.906250e-03 : f32
      %12 = vector.broadcast %cst_11 : f32 to vector<2x4xf32>
      %13 = arith.mulf %11, %12 : vector<2x4xf32>
      %14 = arith.truncf %13 : vector<2x4xf32> to vector<2x4xbf16>
      %c0_12 = arith.constant 0 : index
      %c0_13 = arith.constant 0 : index
      %15 = vector.load %arg3[%c0_12, %c0_13] : memref<4x128xbf16, #tpu.memory_space<vmem>>, vector<4x128xbf16>
      %cst_14 = arith.constant dense<0.000000e+00> : vector<2x128xf32>
      %16 = tpu.matmul %14, %15, %cst_14 {dimension_numbers = #tpu.dot_dimension_numbers<[1], [0], [0], [1], [0, 0, 1, 1], [], []>} : vector<2x4xbf16>, vector<4x128xbf16>, vector<2x128xf32> -> vector<2x128xf32>
      %c0_15 = arith.constant 0 : index
      %c0_16 = arith.constant 0 : index
      %17 = vector.load %arg4[%c0_15, %c0_16] : memref<1x128xf32, #tpu.memory_space<vmem>>, vector<1x128xf32>
      %18 = vector.broadcast %17 : vector<1x128xf32> to vector<2x128xf32>
      %19 = arith.addf %16, %18 : vector<2x128xf32>
      %20 = arith.truncf %19 : vector<2x128xf32> to vector<2x128xbf16>
      %c0_17 = arith.constant 0 : index
      %c0_18 = arith.constant 0 : index
      %21 = vector.load %arg5[%c0_17, %c0_18] : memref<128x128xbf16, #tpu.memory_space<vmem>>, vector<128x128xbf16>
      %cst_19 = arith.constant dense<0.000000e+00> : vector<2x128xf32>
      %22 = tpu.matmul %20, %21, %cst_19 {dimension_numbers = #tpu.dot_dimension_numbers<[1], [0], [0], [1], [0, 0, 1, 1], [], []>} : vector<2x128xbf16>, vector<128x128xbf16>, vector<2x128xf32> -> vector<2x128xf32>
      %c0_20 = arith.constant 0 : index
      %c0_21 = arith.constant 0 : index
      %23 = vector.load %arg6[%c0_20, %c0_21] : memref<1x128xf32, #tpu.memory_space<vmem>>, vector<1x128xf32>
      %24 = vector.broadcast %23 : vector<1x128xf32> to vector<2x128xf32>
      %25 = arith.addf %22, %24 : vector<2x128xf32>
      %c0_22 = arith.constant 0 : index
      %c0_23 = arith.constant 0 : index
      %26 = vector.load %arg7[%c0_22, %c0_23] : memref<2x128xf32, #tpu.memory_space<vmem>>, vector<2x128xf32>
      tpu.vector_store %arg7[%c0_22, %c0_23], %25 {strides = array<i32>} : memref<2x128xf32, #tpu.memory_space<vmem>>, vector<2x128xf32>,
    } else {
    }
    return
  }
  func.func @transform_0(%arg0: i32, %arg1: i32) -> (i32, i32, i32) {
    %c0_i32 = arith.constant 0 : i32
    %c0_i32_0 = arith.constant 0 : i32
    return %arg0, %c0_i32, %arg1 : i32, i32, i32
  }
  func.func @transform_1(%arg0: i32, %arg1: i32) -> (i32, i32) {
    %c0_i32 = arith.constant 0 : i32
    %c0_i32_0 = arith.constant 0 : i32
    %c0_i32_1 = arith.constant 0 : i32
    return %c0_i32, %c0_i32_0 : i32, i32
  }
  func.func @transform_2(%arg0: i32, %arg1: i32) -> (i32, i32) {
    %c0_i32 = arith.constant 0 : i32
    %c0_i32_0 = arith.constant 0 : i32
    %c0_i32_1 = arith.constant 0 : i32
    return %c0_i32, %c0_i32_0 : i32, i32
  }
  func.func @transform_3(%arg0: i32, %arg1: i32) -> (i32, i32) {
    %c0_i32 = arith.constant 0 : i32
    %c0_i32_0 = arith.constant 0 : i32
    %c0_i32_1 = arith.constant 0 : i32
    return %c0_i32, %c0_i32_0 : i32, i32
  }
  func.func @transform_4(%arg0: i32, %arg1: i32) -> (i32, i32) {
    %c0_i32 = arith.constant 0 : i32
    %c0_i32_0 = arith.constant 0 : i32
    %c0_i32_1 = arith.constant 0 : i32
    return %c0_i32, %c0_i32_0 : i32, i32
  }
  func.func @transform_5(%arg0: i32, %arg1: i32) -> (i32, i32) {
    %c0_i32 = arith.constant 0 : i32
    %c0_i32_0 = arith.constant 0 : i32
    return %arg0, %c0_i32 : i32, i32
  }
}

</mosaic_0001>

<llo_original>
// kernel: _forward_jit.1
$region0: #{_forward_jit.1}
  #allocation0 [shape = 'u32[]', space=smem, size = 0x4, offset = 0x4, fixed_abs, tag = 'smem constant byte address 0x4 - core index']
  #allocation1 [shape = 'u32[144,128]{1,0:T(1,128)}', space=vmem, size = 0x12000, scoped, tag = 'internal scratch']
  #allocation2 [shape = 'f32[2,4]{1,0:T(2,128)}', space=vmem, size = 0x400, scoped, tag = 'scratch operand']
  %s0 = inlined_call_operand.vmem [shape: f32[2,4,256], index: 0, kind: input, shape index: {}]
  %s1 = inlined_call_operand.vmem [shape: bf16[4,128], index: 1, kind: input, shape index: {}]
  %s2 = inlined_call_operand.vmem [shape: f32[1,128], index: 2, kind: input, shape index: {}]
  %s3 = inlined_call_operand.vmem [shape: bf16[128,128], index: 3, kind: input, shape index: {}]
  %s4 = inlined_call_operand.vmem [shape: f32[1,128], index: 4, kind: input, shape index: {}]
  %s5 = inlined_call_operand.hbm [shape: f32[2,128], index: 5, kind: output, shape index: {}]
  %s6 = sld [smem:[#allocation0]]
  $region38: #{_forward_jit.1} parent=0
    _
  %s8 = ssub.s32 1, %s6
  %s9 = scalar_select 0, %s8, %s6
  $region1: #{_forward_jit.1} parent=0
    #allocation3 [shape = 'u8[1024]{0}', space=vmem, size = 0x400, scoped, tag = 'output window, operand 0, single buffered']
    #allocation4 [shape = 's32[1]{0}', space=sflag, size = 0x4, scoped, tag = 'scoped memory for _forward_jit.1']
    %10 = vsyncpa [#allocation4], 0
    // Predicated region
    $region2: #{_forward_jit.1} parent=1 // pred_check
      _
    $region3: #{_forward_jit.1} parent=1 // pred_check_branch
      %12 = sbr.rel (0) target = $region5
    $region4: #{_forward_jit.1} parent=1 // pred_region
      _
    $region5: #{_forward_jit.1} parent=1 // pred_fallthru
      _
    // Predicated region
    $region6: #{_forward_jit.1} parent=1 // pred_check
      _
    $region7: #{_forward_jit.1} parent=1 // pred_check_branch
      %14 = sbr.rel (0) target = $region9
    $region8: #{_forward_jit.1} parent=1 // pred_region
      _
    $region9: #{_forward_jit.1} parent=1 // pred_fallthru
      _
    // Predicated region
    $region10: #{_forward_jit.1} parent=1 // pred_check
      _
    $region11: #{_forward_jit.1} parent=1 // pred_check_branch
      %16 = sbr.rel (0) target = $region13
    $region12: #{_forward_jit.1} parent=1 // pred_region
      _
    $region13: #{_forward_jit.1} parent=1 // pred_fallthru
      _
    // Predicated region
    $region14: #{_forward_jit.1} parent=1 // pred_check
      _
    $region15: #{_forward_jit.1} parent=1 // pred_check_branch
      %18 = sbr.rel (0) target = $region17
    $region16: #{_forward_jit.1} parent=1 // pred_region
      _
    $region17: #{_forward_jit.1} parent=1 // pred_fallthru
      _
    // Predicated region
    $region18: #{_forward_jit.1} parent=1 // pred_check
      _
    $region19: #{_forward_jit.1} parent=1 // pred_check_branch
      %20 = sbr.rel (0) target = $region21
    $region20: #{_forward_jit.1} parent=1 // pred_region
      _
    $region21: #{_forward_jit.1} parent=1 // pred_fallthru
      _
    %p22 = scmp.eq.s32.totalorder 0, 0
    // Predicated region
    $region22: #{_forward_jit.1} parent=1 // pred_check
      %p23 = pneg %p22
    $region23: #{_forward_jit.1} parent=1 // pred_check_branch
      %25 = sbr.rel (%p23) target = $region25
    $region24: #{_forward_jit.1} parent=1 // pred_region
      %vm26 = vcmask 25600
      %27 = vst.msk [vmem:[#allocation2] sm:$0x3] %vm26, 0.0
    $region25: #{_forward_jit.1} parent=1 // pred_fallthru
      _
    %v28 = vld [vmem:[%s0] sm:$0xff]
    %v29 = vld [vmem:[%s0 + $0x8] sm:$0xff]
    %v30 = vld [vmem:[#allocation2] sm:$0x3]
    %v33 = vcombine.high %v28, %v28
    %v34 = vcombine.high %v29, %v29
    %vm37 = vcmask 1043456
    %v38 = vsel %vm37, %v28, 0.0
    %v39 = vsel %vm37, %v33, 0.0
    %v40 = vadd.f32 %v38, %v39
    %41 = vadd.xlane.f32.xlu0 %v40
    %v42 = vpop.xlane.xlu0 %41
    %v43 = vsel %vm37, %v29, 0.0
    %v44 = vsel %vm37, %v34, 0.0
    %v45 = vadd.f32 %v43, %v44
    %46 = vadd.xlane.f32.xlu0 %v45
    %v47 = vpop.xlane.xlu0 %46
    %v50 = vlaneseq
    %v51 = vand.u32 %v50, 127
    %v52 = vlaneseq
    %v53 = vshrl.u32 %v52, 7
    %v54 = vsub.s32 %v51, %v53
    %v55 = vrot.slane %v42, %v54
    %v56 = vlaneseq
    %v57 = vshrl.u32 %v56, 7
    %v58 = vsub.s32 %v51, %v57
    %v59 = vrot.slane %v47, %v58
    %vm60 = vcmask 1041409
    %v61 = vsel %vm60, %v59, %v55
    %v63 = vadd.f32 %v30, %v61
    %vm64 = vcmask 25600
    %65 = vst.msk [vmem:[#allocation2] sm:$0x3] %vm64, %v63
    // Predicated region
    $region26: #{_forward_jit.1} parent=1 // pred_check
      %p66 = pneg %p22
    $region27: #{_forward_jit.1} parent=1 // pred_check_branch
      %68 = sbr.rel (%p66) target = $region29
    $region28: #{_forward_jit.1} parent=1 // pred_region
      %v69 = vld [vmem:[#allocation2] sm:$0x3]
      %v70 = vmul.f32 %v69, 0.00390625
      %v71 = vpack.c.bf16 %v70, %v70
      %v72 = vld [vmem:[%s1] sm:$0x3]
      %v73 = vld [vmem:[%s2] sm:$0x1]
      %v75 = vlaneseq
      %v76 = vshrl.u32 %v75, 7
      %v77 = vsub.s32 0, %v76
      %v78 = vrot.slane %v73, %v77
      %vm80 = vcmask 31744
      %v82 = vsel %vm80, %v71, 0
      %vm84 = vcmask 1041408
      %v86 = vsel %vm84, %v72, 0
      %88 = vmatprep.subr.bf16.mxu0 0
      %89 = vmatpush1.bf16.msra.mxu0 %v86
      %90 = vmatprep.subr.bf16.mxu0 0
      %91 = vmatpush1.bf16.msra.mxu0 0
      %92 = vmatprep.subr.bf16.mxu0 0
      %93 = vmatpush1.bf16.msra.mxu0 0
      %94 = vmatprep.subr.bf16.mxu0 0
      %95 = vmatpush1.bf16.msra.mxu0 0
      %96 = vmatprep.subr.bf16.mxu0 0
      %97 = vmatpush1.bf16.msra.mxu0 0
      %98 = vmatprep.subr.bf16.mxu0 0
      %99 = vmatpush1.bf16.msra.mxu0 0
      %100 = vmatprep.subr.bf16.mxu0 0
      %101 = vmatpush1.bf16.msra.mxu0 0
      %102 = vmatprep.subr.bf16.mxu0 0
      %103 = vmatpush1.bf16.msra.mxu0 0
      %104 = vmatprep.subr.bf16.mxu0 0
      %105 = vmatpush1.bf16.msra.mxu0 0
      %106 = vmatprep.subr.bf16.mxu0 0
      %107 = vmatpush1.bf16.msra.mxu0 0
      %108 = vmatprep.subr.bf16.mxu0 0
      %109 = vmatpush1.bf16.msra.mxu0 0
      %110 = vmatprep.subr.bf16.mxu0 0
      %111 = vmatpush1.bf16.msra.mxu0 0
      %112 = vmatprep.subr.bf16.mxu0 0
      %113 = vmatpush1.bf16.msra.mxu0 0
      %114 = vmatprep.subr.bf16.mxu0 0
      %115 = vmatpush1.bf16.msra.mxu0 0
      %116 = vmatprep.subr.bf16.mxu0 0
      %117 = vmatpush1.bf16.msra.mxu0 0
      %118 = vmatprep.subr.bf16.mxu0 0
      %119 = vmatpush1.bf16.msra.mxu0 0
      %120 = vmatprep.mubr.bf16.mxu0 0
      %121 = vmatmul.mubr.bf16.gmra.mrb[0].mxu0 %v82
      %v122 = vpop.f32.mrb[0].mxu0
      %v123 = vadd.f32 %v78, %v122
      %v124 = vpop.f32.mrb[0].mxu0
      %v125 = vpop.f32.mrb[0].mxu0
      %v126 = vpop.f32.mrb[0].mxu0
      %127 = vdwg.mxu0
      %v128 = vpack.c.bf16 %v123, %v123
      %v129 = vld [vmem:[%s3] sm:$0xf]
      %v130 = vld [vmem:[%s3 + $0x4] sm:$0xf]
      %v131 = vld [vmem:[%s3 + $0x8] sm:$0xf]
      %v132 = vld [vmem:[%s3 + $0xc] sm:$0xf]
      %v133 = vld [vmem:[%s3 + $0x10] sm:$0xf]
      %v134 = vld [vmem:[%s3 + $0x14] sm:$0xf]
      %v135 = vld [vmem:[%s3 + $0x18] sm:$0xf]
      %v136 = vld [vmem:[%s3 + $0x1c] sm:$0xf]
      %v137 = vld [vmem:[%s3 + $0x20] sm:$0xf]
      %v138 = vld [vmem:[%s3 + $0x24] sm:$0xf]
      %v139 = vld [vmem:[%s3 + $0x28] sm:$0xf]
      %v140 = vld [vmem:[%s3 + $0x2c] sm:$0xf]
      %v141 = vld [vmem:[%s3 + $0x30] sm:$0xf]
      %v142 = vld [vmem:[%s3 + $0x34] sm:$0xf]
      %v143 = vld [vmem:[%s3 + $0x38] sm:$0xf]
      %v144 = vld [vmem:[%s3 + $0x3c] sm:$0xf]
      %v145 = vld [vmem:[%s4] sm:$0x1]
      %v147 = vlaneseq
      %v148 = vshrl.u32 %v147, 7
      %v149 = vsub.s32 0, %v148
      %v150 = vrot.slane %v145, %v149
      %v168 = vunpack.c.l.b16 %v129
      %v169 = vunpack.c.l.b16 %v130
      %v170 = vunpack.c.l.b16 %v131
      %v171 = vunpack.c.l.b16 %v132
      %v172 = vunpack.c.l.b16 %v133
      %v173 = vunpack.c.l.b16 %v134
      %v174 = vunpack.c.l.b16 %v135
      %v175 = vunpack.c.l.b16 %v136
      %v176 = vunpack.c.l.b16 %v137
      %v177 = vunpack.c.l.b16 %v138
      %v178 = vunpack.c.l.b16 %v139
      %v179 = vunpack.c.l.b16 %v140
      %v180 = vunpack.c.l.b16 %v141
      %v181 = vunpack.c.l.b16 %v142
      %v182 = vunpack.c.l.b16 %v143
      %v183 = vunpack.c.l.b16 %v144
      %v184 = vpack.c.b16 %v169, %v168
      %v185 = vpack.c.b16 %v171, %v170
      %v186 = vpack.c.b16 %v173, %v172
      %v187 = vpack.c.b16 %v175, %v174
      %v188 = vpack.c.b16 %v177, %v176
      %v189 = vpack.c.b16 %v179, %v178
      %v190 = vpack.c.b16 %v181, %v180
      %v191 = vpack.c.b16 %v183, %v182
      %200 = vmatprep.subr.bf16.mxu0 0
      %201 = vmatpush1.bf16.msra.mxu0 %v184
      %202 = vmatprep.subr.bf16.mxu0 0
      %203 = vmatpush1.bf16.msra.mxu0 %v185
      %204 = vmatprep.subr.bf16.mxu0 0
      %205 = vmatpush1.bf16.msra.mxu0 %v186
      %206 = vmatprep.subr.bf16.mxu0 0
      %207 = vmatpush1.bf16.msra.mxu0 %v187
      %208 = vmatprep.subr.bf16.mxu0 0
      %209 = vmatpush1.bf16.msra.mxu0 %v188
      %210 = vmatprep.subr.bf16.mxu0 0
      %211 = vmatpush1.bf16.msra.mxu0 %v189
      %212 = vmatprep.subr.bf16.mxu0 0
      %213 = vmatpush1.bf16.msra.mxu0 %v190
      %214 = vmatprep.subr.bf16.mxu0 0
      %215 = vmatpush1.bf16.msra.mxu0 %v191
      %216 = vmatprep.subr.bf16.mxu0 0
      %217 = vmatpush1.bf16.msra.mxu0 0
      %218 = vmatprep.subr.bf16.mxu0 0
      %219 = vmatpush1.bf16.msra.mxu0 0
      %220 = vmatprep.subr.bf16.mxu0 0
      %221 = vmatpush1.bf16.msra.mxu0 0
      %222 = vmatprep.subr.bf16.mxu0 0
      %223 = vmatpush1.bf16.msra.mxu0 0
      %224 = vmatprep.subr.bf16.mxu0 0
      %225 = vmatpush1.bf16.msra.mxu0 0
      %226 = vmatprep.subr.bf16.mxu0 0
      %227 = vmatpush1.bf16.msra.mxu0 0
      %228 = vmatprep.subr.bf16.mxu0 0
      %229 = vmatpush1.bf16.msra.mxu0 0
      %230 = vmatprep.subr.bf16.mxu0 0
      %231 = vmatpush1.bf16.msra.mxu0 0
      %232 = vmatprep.mubr.bf16.mxu0 0
      %233 = vmatmul.mubr.bf16.gmra.mrb[0].mxu0 %v128
      %v234 = vpop.f32.mrb[0].mxu0
      %v235 = vadd.f32 %v150, %v234
      %v236 = vpop.f32.mrb[0].mxu0
      %v237 = vpop.f32.mrb[0].mxu0
      %v238 = vpop.f32.mrb[0].mxu0
      %239 = vdwg.mxu0
      %240 = vst [vmem:[#allocation3] sm:$0x3] %v235
    $region29: #{_forward_jit.1} parent=1 // pred_fallthru
      _
    // Predicated region
    $region30: #{_forward_jit.1} parent=1 // pred_check
      _
    $region31: #{_forward_jit.1} parent=1 // pred_check_branch
      %242 = sbr.rel (0) target = $region33
    $region32: #{_forward_jit.1} parent=1 // pred_region
      %s244 = ssub.s32 32, 32
      %245 = vsyncadd [#allocation4], %s244
      %s247 = sshll.u32 [#allocation3], 4
      %s248 = int_to_ptr.vmem [resolvable:$true] %s247
      %250 = dma.vmem_to_hbm [thread:$0]  %s248, 32, %s5, [#allocation4]
    $region33: #{_forward_jit.1} parent=1 // pred_fallthru
      _
    // Predicated region
    $region34: #{_forward_jit.1} parent=1 // pred_check
      _
    $region35: #{_forward_jit.1} parent=1 // pred_check_branch
      %252 = sbr.rel (0) target = $region37
    $region36: #{_forward_jit.1} parent=1 // pred_region
      %253 = dma.done [#allocation4], 32
    $region37: #{_forward_jit.1} parent=1 // pred_fallthru
      _
    %254 = vsyncpa [#allocation4], 1

</llo_original>
